<compile_context>
chip_gen: v7x
topology: tpu7x:2x2x1
jax: 0.10.0
libtpu: 0.0.40
codegen_flags: <defaults>
</compile_context>

<pallas_src>
import jax
import jax.numpy as jnp
from jax.experimental import pallas as pl
from jax.experimental.pallas import tpu as pltpu

EMBEDDING_DIM = 10
HIDDEN_DIM = EMBEDDING_DIM * 5  # 50

LANE = 128
MAX_TILE_M = 2048  # rows per grid step (multiple of 128); ~1 MiB padded input block


def _round_up(x, m):
    return (x + m - 1) // m * m


def setnet_kernel(x_ref, w1_ref, b1_ref, w2_ref, b2_ref, o_ref):
    # x_ref:  (TILE_M, 10)  input rows (features on lanes; padded in VMEM, HBM side contiguous)
    # w1_ref: (50, 10)  b1_ref: (50, 1)   torch layouts, VMEM-resident across the grid
    # w2_ref: (10, 50)  b2_ref: (10, 1)
    # o_ref:  (10, TILE_M)  transposed output: rows on the lane axis -> dense, unmasked stores
    x = x_ref[...]

    # h_T[k, m] = sum_f w1[k, f] * x[m, f]          -> (50, TILE_M)
    h_t = jax.lax.dot_general(
        w1_ref[...], x,
        dimension_numbers=(((1,), (1,)), ((), ())),
        preferred_element_type=jnp.float32,
    ) + b1_ref[...]
    h_t = jax.nn.sigmoid(h_t)

    # y_T[e, m] = sum_k w2[e, k] * h_T[k, m]        -> (10, TILE_M)
    y_t = jax.lax.dot_general(
        w2_ref[...], h_t,
        dimension_numbers=(((1,), (0,)), ((), ())),
        preferred_element_type=jnp.float32,
    ) + b2_ref[...]

    o_ref[...] = y_t.astype(o_ref.dtype)


def setnet_forward(x, w1, b1, w2, b2):
    """x: (..., 10).  w1: (50, 10), b1: (50,), w2: (10, 50), b2: (10,) — torch layouts."""
    orig_shape = x.shape
    assert orig_shape[-1] == EMBEDDING_DIM
    x2d = x.reshape(-1, EMBEDDING_DIM)
    M = x2d.shape[0]

    # Tile the row dimension; keep TILE_M a multiple of 128 (lane width) and pad the tail.
    tile_m = min(MAX_TILE_M, _round_up(max(M, 1), LANE))
    m_pad = _round_up(max(M, 1), tile_m)
    if m_pad != M:
        x2d = jnp.pad(x2d, ((0, m_pad - M), (0, 0)))
    n_tiles = m_pad // tile_m

    b1_col = b1.reshape(-1, 1)  # (50, 1)
    b2_col = b2.reshape(-1, 1)  # (10, 1)

    y_t = pl.pallas_call(
        setnet_kernel,
        out_shape=jax.ShapeDtypeStruct((EMBEDDING_DIM, m_pad), x.dtype),
        grid=(n_tiles,),
        in_specs=[
            pl.BlockSpec((tile_m, EMBEDDING_DIM), lambda i: (i, 0)),       # x tile (pipelined)
            pl.BlockSpec((HIDDEN_DIM, EMBEDDING_DIM), lambda i: (0, 0)),   # w1: resident
            pl.BlockSpec((HIDDEN_DIM, 1), lambda i: (0, 0)),               # b1: resident
            pl.BlockSpec((EMBEDDING_DIM, HIDDEN_DIM), lambda i: (0, 0)),   # w2: resident
            pl.BlockSpec((EMBEDDING_DIM, 1), lambda i: (0, 0)),            # b2: resident
        ],
        out_specs=pl.BlockSpec((EMBEDDING_DIM, tile_m), lambda i: (0, i)),  # lane-dense output
        compiler_params=pltpu.CompilerParams(
            dimension_semantics=("parallel",),      # shard M loop across v7x's 2 TensorCores
            vmem_limit_bytes=32 * 1024 * 1024,      # tiles sized with v7x's 64 MiB VMEM in mind
        ),
    )(x2d, w1, b1_col, w2, b2_col)

    # Single efficient pass back to row-major (..., 10); kernel-side stores stay lane-dense.
    y2d = y_t[:, :M].T
    return y2d.reshape(orig_shape)


def init_params(key):
    """Deterministic init mimicking PyTorch nn.Linear default U[-1/sqrt(fan_in), 1/sqrt(fan_in)]."""
    k1, k2, k3, k4 = jax.random.split(key, 4)
    bound1 = 1.0 / (EMBEDDING_DIM ** 0.5)
    bound2 = 1.0 / (HIDDEN_DIM ** 0.5)
    w1 = jax.random.uniform(k1, (HIDDEN_DIM, EMBEDDING_DIM), jnp.float32, -bound1, bound1)
    b1 = jax.random.uniform(k2, (HIDDEN_DIM,), jnp.float32, -bound1, bound1)
    w2 = jax.random.uniform(k3, (EMBEDDING_DIM, HIDDEN_DIM), jnp.float32, -bound2, bound2)
    b2 = jax.random.uniform(k4, (EMBEDDING_DIM,), jnp.float32, -bound2, bound2)
    return w1, b1, w2, b2


if __name__ == "__main__":
    key = jax.random.PRNGKey(0)
    k_param, k_x = jax.random.split(key)
    w1, b1, w2, b2 = init_params(k_param)

    # Small example: batch=2, set_size=8, embedding_dim=10
    x = jax.random.normal(k_x, (2, 8, EMBEDDING_DIM), jnp.float32)

    y = setnet_forward(x, w1, b1, w2, b2)
    jax.block_until_ready(y)

    # Pure-JAX reference check of the same semantics.
    ref = jax.nn.sigmoid(x @ w1.T + b1) @ w2.T + b2
    assert y.shape == (2, 8, EMBEDDING_DIM)
    assert jnp.allclose(y, ref, atol=1e-5), "mismatch vs reference"

    print("KERNEL_OK")
</pallas_src>

<mosaic_0001>
module attributes {stable_mosaic.version = 11 : i64} {
  func.func @setnet_kernel(%arg0: i32, %arg1: memref<128x10xf32, #tpu.memory_space<vmem>>, %arg2: memref<50x10xf32, #tpu.memory_space<vmem>>, %arg3: memref<50x1xf32, #tpu.memory_space<vmem>>, %arg4: memref<10x50xf32, #tpu.memory_space<vmem>>, %arg5: memref<10x1xf32, #tpu.memory_space<vmem>>, %arg6: memref<10x128xf32, #tpu.memory_space<vmem>>) attributes {dimension_semantics = [#tpu.dimension_semantics<parallel>], iteration_bounds = array<i64: 1>, scalar_prefetch = 0 : i64, scratch_operands = 0 : i64, tpu.core_type = #tpu.core_type<tc>, window_params = [{transform_indices = @transform_0, window_bounds = array<i64: 128, 10>}, {pipeline_mode = #tpu.pipeline_mode<synchronous>, transform_indices = @transform_1, window_bounds = array<i64: 50, 10>}, {pipeline_mode = #tpu.pipeline_mode<synchronous>, transform_indices = @transform_2, window_bounds = array<i64: 50, 1>}, {pipeline_mode = #tpu.pipeline_mode<synchronous>, transform_indices = @transform_3, window_bounds = array<i64: 10, 50>}, {pipeline_mode = #tpu.pipeline_mode<synchronous>, transform_indices = @transform_4, window_bounds = array<i64: 10, 1>}, {transform_indices = @transform_5, window_bounds = array<i64: 10, 128>}]} {
    %c0 = arith.constant 0 : index
    %c0_0 = arith.constant 0 : index
    %0 = vector.load %arg1[%c0, %c0_0] : memref<128x10xf32, #tpu.memory_space<vmem>>, vector<128x10xf32>
    %c0_1 = arith.constant 0 : index
    %c0_2 = arith.constant 0 : index
    %1 = vector.load %arg2[%c0_1, %c0_2] : memref<50x10xf32, #tpu.memory_space<vmem>>, vector<50x10xf32>
    %cst = arith.constant dense<0.000000e+00> : vector<50x128xf32>
    %2 = tpu.matmul %1, %0, %cst {dimension_numbers = #tpu.dot_dimension_numbers<[1], [1], [0], [0], [0, 0, 1, 0], [], []>} : vector<50x10xf32>, vector<128x10xf32>, vector<50x128xf32> -> vector<50x128xf32>
    %c0_3 = arith.constant 0 : index
    %c0_4 = arith.constant 0 : index
    %3 = vector.load %arg3[%c0_3, %c0_4] : memref<50x1xf32, #tpu.memory_space<vmem>>, vector<50x1xf32>
    %4 = vector.broadcast %3 : vector<50x1xf32> to vector<50x128xf32>
    %5 = arith.addf %2, %4 : vector<50x128xf32>
    %6 = arith.negf %5 : vector<50x128xf32>
    %7 = math.exp %6 : vector<50x128xf32>
    %cst_5 = arith.constant 1.000000e+00 : f32
    %8 = vector.broadcast %cst_5 : f32 to vector<50x128xf32>
    %9 = arith.addf %8, %7 : vector<50x128xf32>
    %10 = arith.divf %8, %9 : vector<50x128xf32>
    %c0_6 = arith.constant 0 : index
    %c0_7 = arith.constant 0 : index
    %11 = vector.load %arg4[%c0_6, %c0_7] : memref<10x50xf32, #tpu.memory_space<vmem>>, vector<10x50xf32>
    %cst_8 = arith.constant dense<0.000000e+00> : vector<10x128xf32>
    %12 = tpu.matmul %11, %10, %cst_8 {dimension_numbers = #tpu.dot_dimension_numbers<[1], [0], [0], [1], [0, 0, 1, 1], [], []>} : vector<10x50xf32>, vector<50x128xf32>, vector<10x128xf32> -> vector<10x128xf32>
    %c0_9 = arith.constant 0 : index
    %c0_10 = arith.constant 0 : index
    %13 = vector.load %arg5[%c0_9, %c0_10] : memref<10x1xf32, #tpu.memory_space<vmem>>, vector<10x1xf32>
    %14 = vector.broadcast %13 : vector<10x1xf32> to vector<10x128xf32>
    %15 = arith.addf %12, %14 : vector<10x128xf32>
    %c0_11 = arith.constant 0 : index
    %c0_12 = arith.constant 0 : index
    %16 = vector.load %arg6[%c0_11, %c0_12] : memref<10x128xf32, #tpu.memory_space<vmem>>, vector<10x128xf32>
    tpu.vector_store %arg6[%c0_11, %c0_12], %15 {strides = array<i32>} : memref<10x128xf32, #tpu.memory_space<vmem>>, vector<10x128xf32>,
    return
  }
  func.func @transform_0(%arg0: i32) -> (i32, i32) {
    %c0_i32 = arith.constant 0 : i32
    %c0_i32_0 = arith.constant 0 : i32
    return %arg0, %c0_i32 : i32, i32
  }
  func.func @transform_1(%arg0: i32) -> (i32, i32) {
    %c0_i32 = arith.constant 0 : i32
    %c0_i32_0 = arith.constant 0 : i32
    %c0_i32_1 = arith.constant 0 : i32
    return %c0_i32, %c0_i32_0 : i32, i32
  }
  func.func @transform_2(%arg0: i32) -> (i32, i32) {
    %c0_i32 = arith.constant 0 : i32
    %c0_i32_0 = arith.constant 0 : i32
    %c0_i32_1 = arith.constant 0 : i32
    return %c0_i32, %c0_i32_0 : i32, i32
  }
  func.func @transform_3(%arg0: i32) -> (i32, i32) {
    %c0_i32 = arith.constant 0 : i32
    %c0_i32_0 = arith.constant 0 : i32
    %c0_i32_1 = arith.constant 0 : i32
    return %c0_i32, %c0_i32_0 : i32, i32
  }
  func.func @transform_4(%arg0: i32) -> (i32, i32) {
    %c0_i32 = arith.constant 0 : i32
    %c0_i32_0 = arith.constant 0 : i32
    %c0_i32_1 = arith.constant 0 : i32
    return %c0_i32, %c0_i32_0 : i32, i32
  }
  func.func @transform_5(%arg0: i32) -> (i32, i32) {
    %c0_i32 = arith.constant 0 : i32
    %c0_i32_0 = arith.constant 0 : i32
    return %c0_i32, %arg0 : i32, i32
  }
}

</mosaic_0001>

<llo_original>
// kernel: tpu_custom_call.1
$region0: #{tpu_custom_call.1}
  #allocation0 [shape = 'u32[]', space=smem, size = 0x4, offset = 0x4, fixed_abs, tag = 'smem constant byte address 0x4 - core index']
  #allocation1 [shape = 'u32[144,128]{1,0:T(1,128)}', space=vmem, size = 0x12000, scoped, tag = 'internal scratch']
  %s0 = inlined_call_operand.vmem [shape: f32[128,10], index: 0, kind: input, shape index: {}]
  %s1 = inlined_call_operand.vmem [shape: f32[50,10], index: 1, kind: input, shape index: {}]
  %s2 = inlined_call_operand.vmem [shape: f32[50,1], index: 2, kind: input, shape index: {}]
  %s3 = inlined_call_operand.vmem [shape: f32[10,50], index: 3, kind: input, shape index: {}]
  %s4 = inlined_call_operand.vmem [shape: f32[10,1], index: 4, kind: input, shape index: {}]
  %s5 = inlined_call_operand.hbm [shape: f32[10,128], index: 5, kind: output, shape index: {}]
  %s6 = sld [smem:[#allocation0]]
  $region30: #{tpu_custom_call.1} parent=0
    _
  %s8 = ssub.s32 1, %s6
  %s9 = scalar_select 0, %s8, %s6
  $region1: #{tpu_custom_call.1} parent=0
    #allocation2 [shape = 'u8[8192]{0}', space=vmem, size = 0x2000, scoped, tag = 'output window, operand 0, single buffered']
    #allocation3 [shape = 's32[1]{0}', space=sflag, size = 0x4, scoped, tag = 'scoped memory for tpu_custom_call.1']
    %10 = vsyncpa [#allocation3], 0
    // Predicated region
    $region2: #{tpu_custom_call.1} parent=1 // pred_check
      _
    $region3: #{tpu_custom_call.1} parent=1 // pred_check_branch
      %12 = sbr.rel (0) target = $region5
    $region4: #{tpu_custom_call.1} parent=1 // pred_region
      _
    $region5: #{tpu_custom_call.1} parent=1 // pred_fallthru
      _
    // Predicated region
    $region6: #{tpu_custom_call.1} parent=1 // pred_check
      _
    $region7: #{tpu_custom_call.1} parent=1 // pred_check_branch
      %14 = sbr.rel (0) target = $region9
    $region8: #{tpu_custom_call.1} parent=1 // pred_region
      _
    $region9: #{tpu_custom_call.1} parent=1 // pred_fallthru
      _
    // Predicated region
    $region10: #{tpu_custom_call.1} parent=1 // pred_check
      _
    $region11: #{tpu_custom_call.1} parent=1 // pred_check_branch
      %16 = sbr.rel (0) target = $region13
    $region12: #{tpu_custom_call.1} parent=1 // pred_region
      _
    $region13: #{tpu_custom_call.1} parent=1 // pred_fallthru
      _
    // Predicated region
    $region14: #{tpu_custom_call.1} parent=1 // pred_check
      _
    $region15: #{tpu_custom_call.1} parent=1 // pred_check_branch
      %18 = sbr.rel (0) target = $region17
    $region16: #{tpu_custom_call.1} parent=1 // pred_region
      _
    $region17: #{tpu_custom_call.1} parent=1 // pred_fallthru
      _
    // Predicated region
    $region18: #{tpu_custom_call.1} parent=1 // pred_check
      _
    $region19: #{tpu_custom_call.1} parent=1 // pred_check_branch
      %20 = sbr.rel (0) target = $region21
    $region20: #{tpu_custom_call.1} parent=1 // pred_region
      _
    $region21: #{tpu_custom_call.1} parent=1 // pred_fallthru
      _
    %v21 = vld [vmem:[%s0] sm:$0xff]
    %v22 = vld [vmem:[%s0 + $0x8] sm:$0xff]
    %v23 = vld [vmem:[%s0 + $0x10] sm:$0xff]
    %v24 = vld [vmem:[%s0 + $0x18] sm:$0xff]
    %v25 = vld [vmem:[%s0 + $0x20] sm:$0xff]
    %v26 = vld [vmem:[%s0 + $0x28] sm:$0xff]
    %v27 = vld [vmem:[%s0 + $0x30] sm:$0xff]
    %v28 = vld [vmem:[%s0 + $0x38] sm:$0xff]
    %v29 = vld [vmem:[%s0 + $0x40] sm:$0xff]
    %v30 = vld [vmem:[%s0 + $0x48] sm:$0xff]
    %v31 = vld [vmem:[%s0 + $0x50] sm:$0xff]
    %v32 = vld [vmem:[%s0 + $0x58] sm:$0xff]
    %v33 = vld [vmem:[%s0 + $0x60] sm:$0xff]
    %v34 = vld [vmem:[%s0 + $0x68] sm:$0xff]
    %v35 = vld [vmem:[%s0 + $0x70] sm:$0xff]
    %v36 = vld [vmem:[%s0 + $0x78] sm:$0xff]
    %v37 = vld [vmem:[%s1] sm:$0xff]
    %v38 = vld [vmem:[%s1 + $0x8] sm:$0xff]
    %v39 = vld [vmem:[%s1 + $0x10] sm:$0xff]
    %v40 = vld [vmem:[%s1 + $0x18] sm:$0xff]
    %v41 = vld [vmem:[%s1 + $0x20] sm:$0xff]
    %v42 = vld [vmem:[%s1 + $0x28] sm:$0xff]
    %v43 = vld [vmem:[%s1 + $0x30] sm:$0x3]
    %v44 = vld [vmem:[%s2] sm:$0xff]
    %v45 = vld [vmem:[%s2 + $0x8] sm:$0xff]
    %v46 = vld [vmem:[%s2 + $0x10] sm:$0xff]
    %v47 = vld [vmem:[%s2 + $0x18] sm:$0xff]
    %v48 = vld [vmem:[%s2 + $0x20] sm:$0xff]
    %v49 = vld [vmem:[%s2 + $0x28] sm:$0xff]
    %v50 = vld [vmem:[%s2 + $0x30] sm:$0x3]
    %52 = vset.pattern.permute.xlu0 0
    %53 = vperm.xlu0 %52, %v44
    %v54 = vpop.permute.xlu0 %53
    %57 = vset.pattern.permute.xlu0 0
    %58 = vperm.xlu0 %57, %v45
    %v59 = vpop.permute.xlu0 %58
    %62 = vset.pattern.permute.xlu0 0
    %63 = vperm.xlu0 %62, %v46
    %v64 = vpop.permute.xlu0 %63
    %67 = vset.pattern.permute.xlu0 0
    %68 = vperm.xlu0 %67, %v47
    %v69 = vpop.permute.xlu0 %68
    %72 = vset.pattern.permute.xlu0 0
    %73 = vperm.xlu0 %72, %v48
    %v74 = vpop.permute.xlu0 %73
    %77 = vset.pattern.permute.xlu0 0
    %78 = vperm.xlu0 %77, %v49
    %v79 = vpop.permute.xlu0 %78
    %82 = vset.pattern.permute.xlu0 0
    %83 = vperm.xlu0 %82, %v50
    %v84 = vpop.permute.xlu0 %83
    %vm86 = vcmask 80896
    %v88 = vsel %vm86, %v37, 0
    %v91 = vsel %vm86, %v38, 0
    %v94 = vsel %vm86, %v39, 0
    %v97 = vsel %vm86, %v40, 0
    %v100 = vsel %vm86, %v41, 0
    %v103 = vsel %vm86, %v42, 0
    %v106 = vsel %vm86, %v43, 0
    %v109 = vsel %vm86, %v21, 0
    %v112 = vsel %vm86, %v22, 0
    %v115 = vsel %vm86, %v23, 0
    %v118 = vsel %vm86, %v24, 0
    %v121 = vsel %vm86, %v25, 0
    %v124 = vsel %vm86, %v26, 0
    %v127 = vsel %vm86, %v27, 0
    %v130 = vsel %vm86, %v28, 0
    %v133 = vsel %vm86, %v29, 0
    %v136 = vsel %vm86, %v30, 0
    %v139 = vsel %vm86, %v31, 0
    %v142 = vsel %vm86, %v32, 0
    %v145 = vsel %vm86, %v33, 0
    %v148 = vsel %vm86, %v34, 0
    %v151 = vsel %vm86, %v35, 0
    %v154 = vsel %vm86, %v36, 0
    %156 = vmatprep.subr.mxu0 0.0
    %157 = vmatpush1.xpose.msra.mxu0 %v109
    %158 = vmatprep.subr.mxu0 0.0
    %159 = vmatpush1.xpose.msra.mxu0 %v112
    %160 = vmatprep.subr.mxu0 0.0
    %161 = vmatpush1.xpose.msra.mxu0 %v115
    %162 = vmatprep.subr.mxu0 0.0
    %163 = vmatpush1.xpose.msra.mxu0 %v118
    %164 = vmatprep.subr.mxu0 0.0
    %165 = vmatpush1.xpose.msra.mxu0 %v121
    %166 = vmatprep.subr.mxu0 0.0
    %167 = vmatpush1.xpose.msra.mxu0 %v124
    %168 = vmatprep.subr.mxu0 0.0
    %169 = vmatpush1.xpose.msra.mxu0 %v127
    %170 = vmatprep.subr.mxu0 0.0
    %171 = vmatpush1.xpose.msra.mxu0 %v130
    %172 = vmatprep.subr.mxu0 0.0
    %173 = vmatpush1.xpose.msra.mxu0 %v133
    %174 = vmatprep.subr.mxu0 0.0
    %175 = vmatpush1.xpose.msra.mxu0 %v136
    %176 = vmatprep.subr.mxu0 0.0
    %177 = vmatpush1.xpose.msra.mxu0 %v139
    %178 = vmatprep.subr.mxu0 0.0
    %179 = vmatpush1.xpose.msra.mxu0 %v142
    %180 = vmatprep.subr.mxu0 0.0
    %181 = vmatpush1.xpose.msra.mxu0 %v145
    %182 = vmatprep.subr.mxu0 0.0
    %183 = vmatpush1.xpose.msra.mxu0 %v148
    %184 = vmatprep.subr.mxu0 0.0
    %185 = vmatpush1.xpose.msra.mxu0 %v151
    %186 = vmatprep.subr.mxu0 0.0
    %187 = vmatpush1.xpose.msra.mxu0 %v154
    %188 = vmatprep.subr.mxu0 0.0
    %189 = vmatpush1.xpose.msra.mxu0 0.0
    %190 = vmatprep.subr.mxu0 0.0
    %191 = vmatpush1.xpose.msra.mxu0 0.0
    %192 = vmatprep.subr.mxu0 0.0
    %193 = vmatpush1.xpose.msra.mxu0 0.0
    %194 = vmatprep.subr.mxu0 0.0
    %195 = vmatpush1.xpose.msra.mxu0 0.0
    %196 = vmatprep.subr.mxu0 0.0
    %197 = vmatpush1.xpose.msra.mxu0 0.0
    %198 = vmatprep.subr.mxu0 0.0
    %199 = vmatpush1.xpose.msra.mxu0 0.0
    %200 = vmatprep.subr.mxu0 0.0
    %201 = vmatpush1.xpose.msra.mxu0 0.0
    %202 = vmatprep.subr.mxu0 0.0
    %203 = vmatpush1.xpose.msra.mxu0 0.0
    %204 = vmatprep.subr.mxu0 0.0
    %205 = vmatpush1.xpose.msra.mxu0 0.0
    %206 = vmatprep.subr.mxu0 0.0
    %207 = vmatpush1.xpose.msra.mxu0 0.0
    %208 = vmatprep.subr.mxu0 0.0
    %209 = vmatpush1.xpose.msra.mxu0 0.0
    %210 = vmatprep.subr.mxu0 0.0
    %211 = vmatpush1.xpose.msra.mxu0 0.0
    %212 = vmatprep.subr.mxu0 0.0
    %213 = vmatpush1.xpose.msra.mxu0 0.0
    %214 = vmatprep.subr.mxu0 0.0
    %215 = vmatpush1.xpose.msra.mxu0 0.0
    %216 = vmatprep.subr.mxu0 0.0
    %217 = vmatpush1.xpose.msra.mxu0 0.0
    %218 = vmatprep.subr.mxu0 0.0
    %219 = vmatpush1.xpose.msra.mxu0 0.0
    %220 = vmatprep.mubr.f32.mxu0 0.0
    %221 = vmatmul.mubr.f32.gmra.mrb[0].mxu0 %v88
    %v222 = vpop.f32.mrb[0].mxu0
    %v223 = vadd.f32 %v54, %v222
    %v224 = vpop.f32.mrb[0].mxu0
    %225 = vmatprep.mubr.f32.mxu0 0.0
    %226 = vmatmul.mubr.f32.gmra.mrb[0].mxu0 %v91
    %v227 = vpop.f32.mrb[0].mxu0
    %v228 = vadd.f32 %v59, %v227
    %v229 = vpop.f32.mrb[0].mxu0
    %230 = vmatprep.mubr.f32.mxu0 0.0
    %231 = vmatmul.mubr.f32.gmra.mrb[0].mxu0 %v94
    %v232 = vpop.f32.mrb[0].mxu0
    %v233 = vadd.f32 %v64, %v232
    %v234 = vpop.f32.mrb[0].mxu0
    %235 = vmatprep.mubr.f32.mxu0 0.0
    %236 = vmatmul.mubr.f32.gmra.mrb[0].mxu0 %v97
    %v237 = vpop.f32.mrb[0].mxu0
    %v238 = vadd.f32 %v69, %v237
    %v239 = vpop.f32.mrb[0].mxu0
    %240 = vmatprep.mubr.f32.mxu0 0.0
    %241 = vmatmul.mubr.f32.gmra.mrb[0].mxu0 %v100
    %v242 = vpop.f32.mrb[0].mxu0
    %v243 = vadd.f32 %v74, %v242
    %v244 = vpop.f32.mrb[0].mxu0
    %245 = vmatprep.mubr.f32.mxu0 0.0
    %246 = vmatmul.mubr.f32.gmra.mrb[0].mxu0 %v103
    %v247 = vpop.f32.mrb[0].mxu0
    %v248 = vadd.f32 %v79, %v247
    %v249 = vpop.f32.mrb[0].mxu0
    %250 = vmatprep.mubr.f32.mxu0 0.0
    %251 = vmatmul.mubr.f32.gmra.mrb[0].mxu0 %v106
    %v252 = vpop.f32.mrb[0].mxu0
    %v253 = vadd.f32 %v84, %v252
    %v254 = vpop.f32.mrb[0].mxu0
    %255 = vdwg.mxu0
    %v256 = vxor.u32 %v223, 2147483648
    %v257 = vxor.u32 %v228, 2147483648
    %v258 = vxor.u32 %v233, 2147483648
    %v259 = vxor.u32 %v238, 2147483648
    %v260 = vxor.u32 %v243, 2147483648
    %v261 = vxor.u32 %v248, 2147483648
    %v262 = vxor.u32 %v253, 2147483648
    %v263 = vmul.f32 %v256, 1.442695
    %v264 = vpow.pop %v263
    %v265 = vmul.f32 %v257, 1.442695
    %v266 = vpow.pop %v265
    %v267 = vmul.f32 %v258, 1.442695
    %v268 = vpow.pop %v267
    %v269 = vmul.f32 %v259, 1.442695
    %v270 = vpow.pop %v269
    %v271 = vmul.f32 %v260, 1.442695
    %v272 = vpow.pop %v271
    %v273 = vmul.f32 %v261, 1.442695
    %v274 = vpow.pop %v273
    %v275 = vmul.f32 %v262, 1.442695
    %v276 = vpow.pop %v275
    %v277 = vadd.f32 %v264, 1.0
    %v278 = vadd.f32 %v266, 1.0
    %v279 = vadd.f32 %v268, 1.0
    %v280 = vadd.f32 %v270, 1.0
    %v281 = vadd.f32 %v272, 1.0
    %v282 = vadd.f32 %v274, 1.0
    %v283 = vadd.f32 %v276, 1.0
    %v284 = vrcp.pop %v277
    %v285 = vmul.f32 1.0, %v284
    %v286 = vrcp.pop %v278
    %v287 = vmul.f32 1.0, %v286
    %v288 = vrcp.pop %v279
    %v289 = vmul.f32 1.0, %v288
    %v290 = vrcp.pop %v280
    %v291 = vmul.f32 1.0, %v290
    %v292 = vrcp.pop %v281
    %v293 = vmul.f32 1.0, %v292
    %v294 = vrcp.pop %v282
    %v295 = vmul.f32 1.0, %v294
    %v296 = vrcp.pop %v283
    %v297 = vmul.f32 1.0, %v296
    %v298 = vld [vmem:[%s3] sm:$0xff]
    %v299 = vld [vmem:[%s3 + $0x8] sm:$0x3]
    %v300 = vld [vmem:[%s4] sm:$0xff]
    %v301 = vld [vmem:[%s4 + $0x8] sm:$0x3]
    %303 = vset.pattern.permute.xlu0 0
    %304 = vperm.xlu0 %303, %v300
    %v305 = vpop.permute.xlu0 %304
    %308 = vset.pattern.permute.xlu0 0
    %309 = vperm.xlu0 %308, %v301
    %v310 = vpop.permute.xlu0 %309
    %vm312 = vcmask 408576
    %v314 = vsel %vm312, %v298, 0
    %v317 = vsel %vm312, %v299, 0
    %vm319 = vcmask 1041408
    %v321 = vsel %vm319, %v297, 0
    %323 = vmatprep.subr.mxu0 0.0
    %324 = vmatpush1.msra.mxu0 %v285
    %325 = vmatprep.subr.mxu0 0.0
    %326 = vmatpush1.msra.mxu0 %v287
    %327 = vmatprep.subr.mxu0 0.0
    %328 = vmatpush1.msra.mxu0 %v289
    %329 = vmatprep.subr.mxu0 0.0
    %330 = vmatpush1.msra.mxu0 %v291
    %331 = vmatprep.subr.mxu0 0.0
    %332 = vmatpush1.msra.mxu0 %v293
    %333 = vmatprep.subr.mxu0 0.0
    %334 = vmatpush1.msra.mxu0 %v295
    %335 = vmatprep.subr.mxu0 0.0
    %336 = vmatpush1.msra.mxu0 %v321
    %337 = vmatprep.subr.mxu0 0.0
    %338 = vmatpush1.msra.mxu0 0.0
    %339 = vmatprep.subr.mxu0 0.0
    %340 = vmatpush1.msra.mxu0 0.0
    %341 = vmatprep.subr.mxu0 0.0
    %342 = vmatpush1.msra.mxu0 0.0
    %343 = vmatprep.subr.mxu0 0.0
    %344 = vmatpush1.msra.mxu0 0.0
    %345 = vmatprep.subr.mxu0 0.0
    %346 = vmatpush1.msra.mxu0 0.0
    %347 = vmatprep.subr.mxu0 0.0
    %348 = vmatpush1.msra.mxu0 0.0
    %349 = vmatprep.subr.mxu0 0.0
    %350 = vmatpush1.msra.mxu0 0.0
    %351 = vmatprep.subr.mxu0 0.0
    %352 = vmatpush1.msra.mxu0 0.0
    %353 = vmatprep.subr.mxu0 0.0
    %354 = vmatpush1.msra.mxu0 0.0
    %355 = vmatprep.subr.mxu0 0.0
    %356 = vmatpush1.msra.mxu0 0.0
    %357 = vmatprep.subr.mxu0 0.0
    %358 = vmatpush1.msra.mxu0 0.0
    %359 = vmatprep.subr.mxu0 0.0
    %360 = vmatpush1.msra.mxu0 0.0
    %361 = vmatprep.subr.mxu0 0.0
    %362 = vmatpush1.msra.mxu0 0.0
    %363 = vmatprep.subr.mxu0 0.0
    %364 = vmatpush1.msra.mxu0 0.0
    %365 = vmatprep.subr.mxu0 0.0
    %366 = vmatpush1.msra.mxu0 0.0
    %367 = vmatprep.subr.mxu0 0.0
    %368 = vmatpush1.msra.mxu0 0.0
    %369 = vmatprep.subr.mxu0 0.0
    %370 = vmatpush1.msra.mxu0 0.0
    %371 = vmatprep.subr.mxu0 0.0
    %372 = vmatpush1.msra.mxu0 0.0
    %373 = vmatprep.subr.mxu0 0.0
    %374 = vmatpush1.msra.mxu0 0.0
    %375 = vmatprep.subr.mxu0 0.0
    %376 = vmatpush1.msra.mxu0 0.0
    %377 = vmatprep.subr.mxu0 0.0
    %378 = vmatpush1.msra.mxu0 0.0
    %379 = vmatprep.subr.mxu0 0.0
    %380 = vmatpush1.msra.mxu0 0.0
    %381 = vmatprep.subr.mxu0 0.0
    %382 = vmatpush1.msra.mxu0 0.0
    %383 = vmatprep.subr.mxu0 0.0
    %384 = vmatpush1.msra.mxu0 0.0
    %385 = vmatprep.subr.mxu0 0.0
    %386 = vmatpush1.msra.mxu0 0.0
    %387 = vmatprep.mubr.f32.mxu0 0.0
    %388 = vmatmul.mubr.f32.gmra.mrb[0].mxu0 %v314
    %v389 = vpop.f32.mrb[0].mxu0
    %v390 = vadd.f32 %v305, %v389
    %v391 = vpop.f32.mrb[0].mxu0
    %392 = vmatprep.mubr.f32.mxu0 0.0
    %393 = vmatmul.mubr.f32.gmra.mrb[0].mxu0 %v317
    %v394 = vpop.f32.mrb[0].mxu0
    %v395 = vadd.f32 %v310, %v394
    %v396 = vpop.f32.mrb[0].mxu0
    %397 = vdwg.mxu0
    %398 = vst [vmem:[#allocation2] sm:$0xff] %v390
    %399 = vst [vmem:[#allocation2 + $0x8] sm:$0x3] %v395
    // Predicated region
    $region22: #{tpu_custom_call.1} parent=1 // pred_check
      _
    $region23: #{tpu_custom_call.1} parent=1 // pred_check_branch
      %401 = sbr.rel (0) target = $region25
    $region24: #{tpu_custom_call.1} parent=1 // pred_region
      %s403 = ssub.s32 256, 256
      %404 = vsyncadd [#allocation3], %s403
      %s405 = sshll.u32 [#allocation2], 4
      %s406 = int_to_ptr.vmem [resolvable:$true] %s405
      %411 = dma.vmem_to_hbm [thread:$0]  %s406, 256, %s5, [#allocation3], 128, 128, 8
    $region25: #{tpu_custom_call.1} parent=1 // pred_fallthru
      _
    // Predicated region
    $region26: #{tpu_custom_call.1} parent=1 // pred_check
      _
    $region27: #{tpu_custom_call.1} parent=1 // pred_check_branch
      %413 = sbr.rel (0) target = $region29
    $region28: #{tpu_custom_call.1} parent=1 // pred_region
      %414 = dma.done [#allocation3], 256
    $region29: #{tpu_custom_call.1} parent=1 // pred_fallthru
      _
    %415 = vsyncpa [#allocation3], 1

</llo_original>
